<compile_context>
chip_gen: v6e
topology: v6e:2x2x1
jax: 0.10.0
libtpu: 0.0.40
codegen_flags: <defaults>
</compile_context>

<pallas_src>
import functools

import jax
import jax.numpy as jnp
import numpy as np
from jax.experimental import pallas as pl
from jax.experimental.pallas import tpu as pltpu


# ----------------------------------------------------------------------------
# Pallas kernel: chunked max over points -> 3x (Linear+foldedBN+ReLU) -> heads
# ----------------------------------------------------------------------------
def _generator_kernel(x_ref, w1, b1, w2, b2, w3, b3, wp, bp, out_ref,
                      *, num_chunks, chunk_pts):
    tb = x_ref.shape[0]
    d0 = x_ref.shape[2]

    # ---- max over the N points: running max over small ref slices ----------
    # Each iteration only keeps (tb, chunk_pts, d0) + the (tb, d0) carry live,
    # so the pool never blows the register file regardless of N.
    def pool_body(c, acc):
        start = pl.multiple_of(c * chunk_pts, chunk_pts)
        blk = x_ref[:, pl.ds(start, chunk_pts), :]          # (tb, chunk, d0)
        return jnp.maximum(acc, jnp.max(blk, axis=1))

    pooled = jax.lax.fori_loop(
        0, num_chunks, pool_body,
        jnp.full((tb, d0), -jnp.inf, dtype=jnp.float32))     # (tb, d0) f32

    def lbr(h, w_ref, b_ref):
        # Linear (BN folded into weight/bias) + ReLU.
        # bf16 MXU inputs, f32 accumulation, f32 epilogue.
        y = jnp.dot(h.astype(jnp.bfloat16), w_ref[...],
                    preferred_element_type=jnp.float32)
        return jnp.maximum(y + b_ref[...], 0.0)

    h = lbr(pooled, w1, b1)                                  # (tb, 128)
    h = lbr(h, w2, b2)                                       # (tb, 128), cols>=64 zero
    h = lbr(h, w3, b3)                                       # (tb, 128), cols>=32 zero

    # Fused projection heads: columns [0:4]=rot, [4:7]=trans, [7:128]=zero pad.
    y = jnp.dot(h.astype(jnp.bfloat16), wp[...],
                preferred_element_type=jnp.float32) + bp[...]   # (tb, 128)

    # Normalize the rotation quaternion (columns 0..3 only), then a single
    # lane-dense (tb, 128) store.  (rsqrt of zero -> inf matches the reference,
    # which also divides by zero in that degenerate case.)
    col = jax.lax.broadcasted_iota(jnp.int32, y.shape, 1)
    is_rot = col < 4
    r = jnp.where(is_rot, y, 0.0)
    inv_norm = jax.lax.rsqrt(jnp.sum(r * r, axis=-1, keepdims=True))
    out_ref[...] = jnp.where(is_rot, y * inv_norm, y)


def _pick_pool_chunk(n_points, tb, d0):
    """Largest point-chunk from (8,4,2,1) that divides N and keeps one
    chunk's f32 slice within ~32 vregs (128 KiB)."""
    budget = (32 * 1024) // max(tb * d0, 1)     # elements along the point axis
    for c in (8, 4, 2, 1):
        if n_points % c == 0 and (c <= budget or c == 1):
            return c
    return 1


# ----------------------------------------------------------------------------
# Wrapper
# ----------------------------------------------------------------------------
def generator_forward(x, params, *, tb=None):
    """x: (B, N, emb) f32 -> (rotation (B,4), translation (B,3))."""
    B, N, D0 = x.shape
    if tb is None:
        tb = B          # grid=1 by default: no pipeline overhead on single-TC chips
    assert B % tb == 0, (B, tb)

    chunk = _pick_pool_chunk(N, tb, D0)
    num_chunks = N // chunk

    # Padded, lane-dense weights (cast once to bf16 = MXU-native) + f32 biases.
    names = ("pw1", "pb1", "pw2", "pb2", "pw3", "pb3", "pwp", "pbp")
    w_args = []
    for name in names:
        arr = params[name]
        if name.startswith("pw"):
            arr = arr.astype(jnp.bfloat16)
        w_args.append(arr)
    out_cols = params["pwp"].shape[1]                         # 128

    def const_spec(arr):                                      # whole array, every step
        return pl.BlockSpec(arr.shape, lambda i: (0, 0))

    grid_spec = pltpu.PrefetchScalarGridSpec(
        num_scalar_prefetch=0,
        grid=(B // tb,),
        in_specs=[pl.BlockSpec((tb, N, D0), lambda i: (i, 0, 0))]
                 + [const_spec(a) for a in w_args],
        out_specs=pl.BlockSpec((tb, out_cols), lambda i: (i, 0)),
    )

    # Cost estimate: four (.,128) matmuls + the point max-pool.
    weight_bytes = sum(int(np.prod(a.shape)) * a.dtype.itemsize for a in w_args)
    matmul_flops = 2 * B * sum(a.shape[0] * a.shape[1] for a in w_args[::2])
    cost = pl.CostEstimate(
        flops=int(matmul_flops + B * N * D0),
        transcendentals=int(B),
        bytes_accessed=int(x.size * x.dtype.itemsize + weight_bytes
                           + B * out_cols * 4))

    # VMEM sizing: x tile + weights + out, double-buffered; only override the
    # compiler default when the tile actually needs it (large tb).
    vmem_need = (2 * tb * N * D0 * x.dtype.itemsize
                 + 2 * weight_bytes + 2 * tb * out_cols * 4)
    vmem_limit = None
    if vmem_need > 12 * 1024 * 1024:
        vmem_limit = int(min(112 * 1024 * 1024, 2 * vmem_need))

    kernel = functools.partial(_generator_kernel,
                               num_chunks=num_chunks, chunk_pts=chunk)

    out = pl.pallas_call(
        kernel,
        grid_spec=grid_spec,
        out_shape=jax.ShapeDtypeStruct((B, out_cols), jnp.float32),
        compiler_params=pltpu.CompilerParams(
            dimension_semantics=("parallel",),
            vmem_limit_bytes=vmem_limit),
        cost_estimate=cost,
    )(x, *w_args)

    rotation = out[:, 0:4]
    translation = out[:, 4:7]
    return rotation, translation


# ----------------------------------------------------------------------------
# Deterministic parameter init (Linear weights + folded inference-mode BN)
# ----------------------------------------------------------------------------
def _round_up(x, m):
    return ((x + m - 1) // m) * m


def init_params(key, emb):
    d0, d1, d2, d3 = emb, emb // 2, emb // 4, emb // 8
    eps = 1e-5
    dims = [(d0, d1), (d1, d2), (d2, d3)]
    keys = jax.random.split(key, 4 * len(dims) + 4)
    params = {}
    for i, (cin, cout) in enumerate(dims):
        kw, kb, kg, kbeta = keys[4 * i: 4 * i + 4]
        w = jax.random.normal(kw, (cin, cout), jnp.float32) / np.sqrt(cin)
        b = 0.1 * jax.random.normal(kb, (cout,), jnp.float32)
        gamma = 1.0 + 0.1 * jax.random.normal(kg, (cout,), jnp.float32)
        beta = 0.1 * jax.random.normal(kbeta, (cout,), jnp.float32)
        # inference-mode BN with fresh running stats: mean=0, var=1
        scale = gamma / np.sqrt(1.0 + eps)
        params[f"w{i + 1}"] = w * scale[None, :]
        params[f"b{i + 1}"] = ((b * scale) + beta)[None, :]        # (1, cout)

    kwr, kbr, kwt, kbt = keys[-4:]
    wr = jax.random.normal(kwr, (d3, 4), jnp.float32) / np.sqrt(d3)
    br = 0.1 * jax.random.normal(kbr, (4,), jnp.float32)
    wt = jax.random.normal(kwt, (d3, 3), jnp.float32) / np.sqrt(d3)
    bt = 0.1 * jax.random.normal(kbt, (3,), jnp.float32)
    params.update(wr=wr, br=br, wt=wt, bt=bt)

    # --- lane-dense padded copies for the kernel -----------------------------
    # Every layer's output (and the next layer's input) is zero-padded up to a
    # multiple of 128 so all activations are lane-dense (tb, 128k) slabs.
    LANE = 128
    p1, p2, p3 = _round_up(d1, LANE), _round_up(d2, LANE), _round_up(d3, LANE)

    def pad_w(w, rows, cols):
        out = jnp.zeros((rows, cols), jnp.float32)
        return out.at[: w.shape[0], : w.shape[1]].set(w)

    def pad_b(b, cols):
        out = jnp.zeros((1, cols), jnp.float32)
        return out.at[:, : b.shape[1]].set(b)

    params["pw1"] = pad_w(params["w1"], d0, p1)
    params["pb1"] = pad_b(params["b1"], p1)
    params["pw2"] = pad_w(params["w2"], p1, p2)
    params["pb2"] = pad_b(params["b2"], p2)
    params["pw3"] = pad_w(params["w3"], p2, p3)
    params["pb3"] = pad_b(params["b3"], p3)
    # Fused, 128-lane-padded projection: cols 0:4 = rot, 4:7 = trans, rest 0.
    wp = jnp.zeros((p3, LANE), jnp.float32).at[:d3, 0:4].set(wr).at[:d3, 4:7].set(wt)
    bp = jnp.zeros((1, LANE), jnp.float32).at[0, 0:4].set(br).at[0, 4:7].set(bt)
    params["pwp"] = wp
    params["pbp"] = bp
    return params


# ----------------------------------------------------------------------------
# Pure-JAX f32 reference (same folded parameters) for a correctness check
# ----------------------------------------------------------------------------
def reference_forward(x, params):
    hi = jax.lax.Precision.HIGHEST
    h = jnp.max(x, axis=1)
    for i in (1, 2, 3):
        h = jnp.maximum(
            jnp.dot(h, params[f"w{i}"], precision=hi) + params[f"b{i}"], 0.0)
    rot = jnp.dot(h, params["wr"], precision=hi) + params["br"]
    trans = jnp.dot(h, params["wt"], precision=hi) + params["bt"]
    rot = rot / jnp.linalg.norm(rot, axis=1, keepdims=True)
    return rot, trans


if __name__ == "__main__":
    key = jax.random.PRNGKey(0)
    kx, kp = jax.random.split(key)

    B, N, EMB = 16, 32, 256     # x: (batch, points, emb_dims)

    x = jax.random.normal(kx, (B, N, EMB), jnp.float32)
    params = init_params(kp, EMB)

    # tb defaults to B (grid=1): best on single-TC v5e/v6e.  On v7x pass
    # tb=B//2 to split the "parallel" batch axis across both TensorCores.
    rot, trans = generator_forward(x, params)
    rot = jax.block_until_ready(rot)
    trans = jax.block_until_ready(trans)

    rot_ref, trans_ref = reference_forward(x, params)
    assert rot.shape == (B, 4) and trans.shape == (B, 3), (rot.shape, trans.shape)

    # Loose tolerance: kernel uses bf16 MXU inputs vs an f32-HIGHEST reference.
    ok_r = np.allclose(np.asarray(rot), np.asarray(rot_ref), rtol=5e-2, atol=2e-2)
    ok_t = np.allclose(np.asarray(trans), np.asarray(trans_ref), rtol=5e-2, atol=2e-2)
    if not (ok_r and ok_t):
        err_r = float(np.max(np.abs(np.asarray(rot) - np.asarray(rot_ref))))
        err_t = float(np.max(np.abs(np.asarray(trans) - np.asarray(trans_ref))))
        raise SystemExit(f"MISMATCH rot_err={err_r} trans_err={err_t}")
    print("KERNEL_OK")
</pallas_src>

<mosaic_0001>
module attributes {stable_mosaic.version = 11 : i64} {
  func.func @_generator_kernel(%arg0: i32, %arg1: memref<16x32x256xf32, #tpu.memory_space<vmem>>, %arg2: memref<256x128xbf16, #tpu.memory_space<vmem>>, %arg3: memref<1x128xf32, #tpu.memory_space<vmem>>, %arg4: memref<128x128xbf16, #tpu.memory_space<vmem>>, %arg5: memref<1x128xf32, #tpu.memory_space<vmem>>, %arg6: memref<128x128xbf16, #tpu.memory_space<vmem>>, %arg7: memref<1x128xf32, #tpu.memory_space<vmem>>, %arg8: memref<128x128xbf16, #tpu.memory_space<vmem>>, %arg9: memref<1x128xf32, #tpu.memory_space<vmem>>, %arg10: memref<16x128xf32, #tpu.memory_space<vmem>>) attributes {dimension_semantics = [#tpu.dimension_semantics<parallel>], iteration_bounds = array<i64: 1>, scalar_prefetch = 0 : i64, scratch_operands = 0 : i64, tpu.core_type = #tpu.core_type<tc>, window_params = [{transform_indices = @transform_0, window_bounds = array<i64: 16, 32, 256>}, {pipeline_mode = #tpu.pipeline_mode<synchronous>, transform_indices = @transform_1, window_bounds = array<i64: 256, 128>}, {pipeline_mode = #tpu.pipeline_mode<synchronous>, transform_indices = @transform_2, window_bounds = array<i64: 1, 128>}, {pipeline_mode = #tpu.pipeline_mode<synchronous>, transform_indices = @transform_3, window_bounds = array<i64: 128, 128>}, {pipeline_mode = #tpu.pipeline_mode<synchronous>, transform_indices = @transform_4, window_bounds = array<i64: 1, 128>}, {pipeline_mode = #tpu.pipeline_mode<synchronous>, transform_indices = @transform_5, window_bounds = array<i64: 128, 128>}, {pipeline_mode = #tpu.pipeline_mode<synchronous>, transform_indices = @transform_6, window_bounds = array<i64: 1, 128>}, {pipeline_mode = #tpu.pipeline_mode<synchronous>, transform_indices = @transform_7, window_bounds = array<i64: 128, 128>}, {pipeline_mode = #tpu.pipeline_mode<synchronous>, transform_indices = @transform_8, window_bounds = array<i64: 1, 128>}, {transform_indices = @transform_9, window_bounds = array<i64: 16, 128>}]} {
    %cst = arith.constant 0xFF800000 : f32
    %0 = vector.broadcast %cst : f32 to vector<16x256xf32>
    %c0_i32 = arith.constant 0 : i32
    %c4_i32 = arith.constant 4 : i32
    %1 = arith.addi %c0_i32, %c4_i32 : i32
    %c1_i32 = arith.constant 1 : i32
    %2 = scf.for %arg11 = %c0_i32 to %1 step %c1_i32 iter_args(%arg12 = %0) -> (vector<16x256xf32>)  : i32 {
      %c8_i32 = arith.constant 8 : i32
      %46 = arith.muli %arg11, %c8_i32 : i32
      %47 = tpu.assume_multiple %46, 8 : i32
      %c0_28 = arith.constant 0 : index
      %48 = arith.index_cast %47 : i32 to index
      %c0_29 = arith.constant 0 : index
      %49 = vector.load %arg1[%c0_28, %48, %c0_29] : memref<16x32x256xf32, #tpu.memory_space<vmem>>, vector<16x8x256xf32>
      %cst_30 = arith.constant dense<0xFF800000> : vector<16x256xf32>
      %50 = vector.multi_reduction <maximumf>, %49, %cst_30 [1] : vector<16x8x256xf32> to vector<16x256xf32>
      %51 = arith.maximumf %arg12, %50 : vector<16x256xf32>
      scf.yield %51 : vector<16x256xf32>
    }
    %c4_i32_0 = arith.constant 4 : i32
    %3 = arith.truncf %2 : vector<16x256xf32> to vector<16x256xbf16>
    %c0 = arith.constant 0 : index
    %c0_1 = arith.constant 0 : index
    %4 = vector.load %arg2[%c0, %c0_1] : memref<256x128xbf16, #tpu.memory_space<vmem>>, vector<256x128xbf16>
    %cst_2 = arith.constant dense<0.000000e+00> : vector<16x128xf32>
    %5 = tpu.matmul %3, %4, %cst_2 {dimension_numbers = #tpu.dot_dimension_numbers<[1], [0], [0], [1], [0, 0, 1, 1], [], []>} : vector<16x256xbf16>, vector<256x128xbf16>, vector<16x128xf32> -> vector<16x128xf32>
    %c0_3 = arith.constant 0 : index
    %c0_4 = arith.constant 0 : index
    %6 = vector.load %arg3[%c0_3, %c0_4] : memref<1x128xf32, #tpu.memory_space<vmem>>, vector<1x128xf32>
    %7 = vector.broadcast %6 : vector<1x128xf32> to vector<16x128xf32>
    %8 = arith.addf %5, %7 : vector<16x128xf32>
    %cst_5 = arith.constant 0.000000e+00 : f32
    %9 = vector.broadcast %cst_5 : f32 to vector<16x128xf32>
    %10 = arith.maximumf %8, %9 : vector<16x128xf32>
    %11 = arith.truncf %10 : vector<16x128xf32> to vector<16x128xbf16>
    %c0_6 = arith.constant 0 : index
    %c0_7 = arith.constant 0 : index
    %12 = vector.load %arg4[%c0_6, %c0_7] : memref<128x128xbf16, #tpu.memory_space<vmem>>, vector<128x128xbf16>
    %cst_8 = arith.constant dense<0.000000e+00> : vector<16x128xf32>
    %13 = tpu.matmul %11, %12, %cst_8 {dimension_numbers = #tpu.dot_dimension_numbers<[1], [0], [0], [1], [0, 0, 1, 1], [], []>} : vector<16x128xbf16>, vector<128x128xbf16>, vector<16x128xf32> -> vector<16x128xf32>
    %c0_9 = arith.constant 0 : index
    %c0_10 = arith.constant 0 : index
    %14 = vector.load %arg5[%c0_9, %c0_10] : memref<1x128xf32, #tpu.memory_space<vmem>>, vector<1x128xf32>
    %15 = vector.broadcast %14 : vector<1x128xf32> to vector<16x128xf32>
    %16 = arith.addf %13, %15 : vector<16x128xf32>
    %cst_11 = arith.constant 0.000000e+00 : f32
    %17 = vector.broadcast %cst_11 : f32 to vector<16x128xf32>
    %18 = arith.maximumf %16, %17 : vector<16x128xf32>
    %19 = arith.truncf %18 : vector<16x128xf32> to vector<16x128xbf16>
    %c0_12 = arith.constant 0 : index
    %c0_13 = arith.constant 0 : index
    %20 = vector.load %arg6[%c0_12, %c0_13] : memref<128x128xbf16, #tpu.memory_space<vmem>>, vector<128x128xbf16>
    %cst_14 = arith.constant dense<0.000000e+00> : vector<16x128xf32>
    %21 = tpu.matmul %19, %20, %cst_14 {dimension_numbers = #tpu.dot_dimension_numbers<[1], [0], [0], [1], [0, 0, 1, 1], [], []>} : vector<16x128xbf16>, vector<128x128xbf16>, vector<16x128xf32> -> vector<16x128xf32>
    %c0_15 = arith.constant 0 : index
    %c0_16 = arith.constant 0 : index
    %22 = vector.load %arg7[%c0_15, %c0_16] : memref<1x128xf32, #tpu.memory_space<vmem>>, vector<1x128xf32>
    %23 = vector.broadcast %22 : vector<1x128xf32> to vector<16x128xf32>
    %24 = arith.addf %21, %23 : vector<16x128xf32>
    %cst_17 = arith.constant 0.000000e+00 : f32
    %25 = vector.broadcast %cst_17 : f32 to vector<16x128xf32>
    %26 = arith.maximumf %24, %25 : vector<16x128xf32>
    %27 = arith.truncf %26 : vector<16x128xf32> to vector<16x128xbf16>
    %c0_18 = arith.constant 0 : index
    %c0_19 = arith.constant 0 : index
    %28 = vector.load %arg8[%c0_18, %c0_19] : memref<128x128xbf16, #tpu.memory_space<vmem>>, vector<128x128xbf16>
    %cst_20 = arith.constant dense<0.000000e+00> : vector<16x128xf32>
    %29 = tpu.matmul %27, %28, %cst_20 {dimension_numbers = #tpu.dot_dimension_numbers<[1], [0], [0], [1], [0, 0, 1, 1], [], []>} : vector<16x128xbf16>, vector<128x128xbf16>, vector<16x128xf32> -> vector<16x128xf32>
    %c0_21 = arith.constant 0 : index
    %c0_22 = arith.constant 0 : index
    %30 = vector.load %arg9[%c0_21, %c0_22] : memref<1x128xf32, #tpu.memory_space<vmem>>, vector<1x128xf32>
    %31 = vector.broadcast %30 : vector<1x128xf32> to vector<16x128xf32>
    %32 = arith.addf %29, %31 : vector<16x128xf32>
    %33 = tpu.iota {dimensions = array<i32: 1>} : vector<16x128xi32>
    %c4_i32_23 = arith.constant 4 : i32
    %34 = vector.broadcast %c4_i32_23 : i32 to vector<16x128xi32>
    %35 = arith.cmpi slt, %33, %34 : vector<16x128xi32>
    %cst_24 = arith.constant 0.000000e+00 : f32
    %36 = vector.broadcast %cst_24 : f32 to vector<16x128xf32>
    %37 = arith.select %35, %32, %36 : vector<16x128xi1>, vector<16x128xf32>
    %38 = arith.mulf %37, %37 : vector<16x128xf32>
    %cst_25 = arith.constant dense<0.000000e+00> : vector<16xf32>
    %39 = vector.multi_reduction <add>, %38, %cst_25 [1] : vector<16x128xf32> to vector<16xf32>
    %40 = vector.shape_cast %39 : vector<16xf32> to vector<16x1xf32>
    %41 = math.rsqrt %40 : vector<16x1xf32>
    %42 = vector.broadcast %41 : vector<16x1xf32> to vector<16x128xf32>
    %43 = arith.mulf %32, %42 : vector<16x128xf32>
    %44 = arith.select %35, %43, %32 : vector<16x128xi1>, vector<16x128xf32>
    %c0_26 = arith.constant 0 : index
    %c0_27 = arith.constant 0 : index
    %45 = vector.load %arg10[%c0_26, %c0_27] : memref<16x128xf32, #tpu.memory_space<vmem>>, vector<16x128xf32>
    tpu.vector_store %arg10[%c0_26, %c0_27], %44 {strides = array<i32>} : memref<16x128xf32, #tpu.memory_space<vmem>>, vector<16x128xf32>,
    return
  }
  func.func @transform_0(%arg0: i32) -> (i32, i32, i32) {
    %c0_i32 = arith.constant 0 : i32
    %c0_i32_0 = arith.constant 0 : i32
    %c0_i32_1 = arith.constant 0 : i32
    return %arg0, %c0_i32, %c0_i32_0 : i32, i32, i32
  }
  func.func @transform_1(%arg0: i32) -> (i32, i32) {
    %c0_i32 = arith.constant 0 : i32
    %c0_i32_0 = arith.constant 0 : i32
    %c0_i32_1 = arith.constant 0 : i32
    return %c0_i32, %c0_i32_0 : i32, i32
  }
  func.func @transform_2(%arg0: i32) -> (i32, i32) {
    %c0_i32 = arith.constant 0 : i32
    %c0_i32_0 = arith.constant 0 : i32
    %c0_i32_1 = arith.constant 0 : i32
    return %c0_i32, %c0_i32_0 : i32, i32
  }
  func.func @transform_3(%arg0: i32) -> (i32, i32) {
    %c0_i32 = arith.constant 0 : i32
    %c0_i32_0 = arith.constant 0 : i32
    %c0_i32_1 = arith.constant 0 : i32
    return %c0_i32, %c0_i32_0 : i32, i32
  }
  func.func @transform_4(%arg0: i32) -> (i32, i32) {
    %c0_i32 = arith.constant 0 : i32
    %c0_i32_0 = arith.constant 0 : i32
    %c0_i32_1 = arith.constant 0 : i32
    return %c0_i32, %c0_i32_0 : i32, i32
  }
  func.func @transform_5(%arg0: i32) -> (i32, i32) {
    %c0_i32 = arith.constant 0 : i32
    %c0_i32_0 = arith.constant 0 : i32
    %c0_i32_1 = arith.constant 0 : i32
    return %c0_i32, %c0_i32_0 : i32, i32
  }
  func.func @transform_6(%arg0: i32) -> (i32, i32) {
    %c0_i32 = arith.constant 0 : i32
    %c0_i32_0 = arith.constant 0 : i32
    %c0_i32_1 = arith.constant 0 : i32
    return %c0_i32, %c0_i32_0 : i32, i32
  }
  func.func @transform_7(%arg0: i32) -> (i32, i32) {
    %c0_i32 = arith.constant 0 : i32
    %c0_i32_0 = arith.constant 0 : i32
    %c0_i32_1 = arith.constant 0 : i32
    return %c0_i32, %c0_i32_0 : i32, i32
  }
  func.func @transform_8(%arg0: i32) -> (i32, i32) {
    %c0_i32 = arith.constant 0 : i32
    %c0_i32_0 = arith.constant 0 : i32
    %c0_i32_1 = arith.constant 0 : i32
    return %c0_i32, %c0_i32_0 : i32, i32
  }
  func.func @transform_9(%arg0: i32) -> (i32, i32) {
    %c0_i32 = arith.constant 0 : i32
    %c0_i32_0 = arith.constant 0 : i32
    return %arg0, %c0_i32 : i32, i32
  }
}

</mosaic_0001>

<llo_original>
// kernel: tpu_custom_call.1
$region0: #{tpu_custom_call.1}
  #allocation0 [shape = 'u32[]', space=smem, size = 0x4, offset = 0x4, fixed_abs, tag = 'smem constant byte address 0x4 - core index']
  #allocation1 [shape = 'u32[144,128]{1,0:T(1,128)}', space=vmem, size = 0x12000, scoped, tag = 'internal scratch']
  %s0 = inlined_call_operand.hbm [shape: f32[16,32,256], index: 0, kind: input, shape index: {}]
  %s1 = inlined_call_operand.hbm [shape: bf16[256,128], index: 1, kind: input, shape index: {}]
  %s2 = inlined_call_operand.vmem [shape: f32[1,128], index: 2, kind: input, shape index: {}]
  %s3 = inlined_call_operand.hbm [shape: bf16[128,128], index: 3, kind: input, shape index: {}]
  %s4 = inlined_call_operand.vmem [shape: f32[1,128], index: 4, kind: input, shape index: {}]
  %s5 = inlined_call_operand.hbm [shape: bf16[128,128], index: 5, kind: input, shape index: {}]
  %s6 = inlined_call_operand.vmem [shape: f32[1,128], index: 6, kind: input, shape index: {}]
  %s7 = inlined_call_operand.hbm [shape: bf16[128,128], index: 7, kind: input, shape index: {}]
  %s8 = inlined_call_operand.vmem [shape: f32[1,128], index: 8, kind: input, shape index: {}]
  %s9 = inlined_call_operand.hbm [shape: f32[16,128], index: 9, kind: output, shape index: {}]
  %s10 = sld [smem:[#allocation0]]
  $region73: #{tpu_custom_call.1} parent=0
    _
  %s12 = ssub.s32 1, %s10
  %s13 = scalar_select 0, %s12, %s10
  $region1: #{tpu_custom_call.1} parent=0
    #allocation2 [shape = 'u8[524288]{0}', space=vmem, size = 0x80000, scoped, tag = 'input window, operand 0, single buffered']
    #allocation3 [shape = 's32[1]{0}', space=sflag, size = 0x4, scoped, tag = 'scoped memory for tpu_custom_call.1']
    #allocation4 [shape = 's32[1]{0}', space=sflag, size = 0x4, scoped, tag = 'scoped memory for tpu_custom_call.1']
    #allocation5 [shape = 'u8[65536]{0}', space=vmem, size = 0x10000, scoped, tag = 'input window, operand 1, single buffered']
    #allocation6 [shape = 's32[1]{0}', space=sflag, size = 0x4, scoped, tag = 'scoped memory for tpu_custom_call.1']
    #allocation7 [shape = 'u8[32768]{0}', space=vmem, size = 0x8000, scoped, tag = 'input window, operand 3, single buffered']
    #allocation8 [shape = 'u8[32768]{0}', space=vmem, size = 0x8000, scoped, tag = 'input window, operand 5, single buffered']
    #allocation9 [shape = 's32[1]{0}', space=sflag, size = 0x4, scoped, tag = 'scoped memory for tpu_custom_call.1']
    #allocation10 [shape = 'u8[32768]{0}', space=vmem, size = 0x8000, scoped, tag = 'input window, operand 7, single buffered']
    #allocation11 [shape = 'u8[8192]{0}', space=vmem, size = 0x2000, scoped, tag = 'output window, operand 0, single buffered']
    %14 = vsyncpa [#allocation3], 0
    %15 = vsyncpa [#allocation6], 0
    %16 = vsyncpa [#allocation9], 0
    %17 = vsyncpa [#allocation4], 0
    // Predicated region
    $region2: #{tpu_custom_call.1} parent=1 // pred_check
      _
    $region3: #{tpu_custom_call.1} parent=1 // pred_check_branch
      %19 = sbr.rel (0) target = $region5
    $region4: #{tpu_custom_call.1} parent=1 // pred_region
      %s21 = ssub.s32 16384, 16384
      %22 = vsyncadd [#allocation3], %s21
      %s23 = sshll.u32 [#allocation2], 4
      %s24 = int_to_ptr.vmem [resolvable:$true] %s23
      %29 = dma.hbm_to_vmem [thread:$0]  %s0, 16384, %s24, [#allocation3], 256, 256, 16
    $region5: #{tpu_custom_call.1} parent=1 // pred_fallthru
      _
    // Predicated region
    $region6: #{tpu_custom_call.1} parent=1 // pred_check
      _
    $region7: #{tpu_custom_call.1} parent=1 // pred_check_branch
      %31 = sbr.rel (0) target = $region9
    $region8: #{tpu_custom_call.1} parent=1 // pred_region
      %s33 = ssub.s32 2048, 2048
      %34 = vsyncadd [#allocation6], %s33
      %s35 = sshll.u32 [#allocation5], 4
      %s36 = int_to_ptr.vmem [resolvable:$true] %s35
      %41 = dma.hbm_to_vmem [thread:$0]  %s1, 2048, %s36, [#allocation6], 64, 64, 4
    $region9: #{tpu_custom_call.1} parent=1 // pred_fallthru
      _
    // Predicated region
    $region10: #{tpu_custom_call.1} parent=1 // pred_check
      _
    $region11: #{tpu_custom_call.1} parent=1 // pred_check_branch
      %43 = sbr.rel (0) target = $region13
    $region12: #{tpu_custom_call.1} parent=1 // pred_region
      _
    $region13: #{tpu_custom_call.1} parent=1 // pred_fallthru
      _
    // Predicated region
    $region14: #{tpu_custom_call.1} parent=1 // pred_check
      _
    $region15: #{tpu_custom_call.1} parent=1 // pred_check_branch
      %45 = sbr.rel (0) target = $region17
    $region16: #{tpu_custom_call.1} parent=1 // pred_region
      %s47 = ssub.s32 1024, 1024
      %48 = vsyncadd [#allocation6], %s47
      %s49 = sshll.u32 [#allocation7], 4
      %s50 = int_to_ptr.vmem [resolvable:$true] %s49
      %55 = dma.hbm_to_vmem [thread:$0]  %s3, 1024, %s50, [#allocation6], 64, 64, 4
    $region17: #{tpu_custom_call.1} parent=1 // pred_fallthru
      _
    // Predicated region
    $region18: #{tpu_custom_call.1} parent=1 // pred_check
      _
    $region19: #{tpu_custom_call.1} parent=1 // pred_check_branch
      %57 = sbr.rel (0) target = $region21
    $region20: #{tpu_custom_call.1} parent=1 // pred_region
      _
    $region21: #{tpu_custom_call.1} parent=1 // pred_fallthru
      _
    // Predicated region
    $region22: #{tpu_custom_call.1} parent=1 // pred_check
      _
    $region23: #{tpu_custom_call.1} parent=1 // pred_check_branch
      %59 = sbr.rel (0) target = $region25
    $region24: #{tpu_custom_call.1} parent=1 // pred_region
      %s61 = ssub.s32 1024, 1024
      %62 = vsyncadd [#allocation9], %s61
      %s63 = sshll.u32 [#allocation8], 4
      %s64 = int_to_ptr.vmem [resolvable:$true] %s63
      %69 = dma.hbm_to_vmem [thread:$0]  %s5, 1024, %s64, [#allocation9], 64, 64, 4
    $region25: #{tpu_custom_call.1} parent=1 // pred_fallthru
      _
    // Predicated region
    $region26: #{tpu_custom_call.1} parent=1 // pred_check
      _
    $region27: #{tpu_custom_call.1} parent=1 // pred_check_branch
      %71 = sbr.rel (0) target = $region29
    $region28: #{tpu_custom_call.1} parent=1 // pred_region
      _
    $region29: #{tpu_custom_call.1} parent=1 // pred_fallthru
      _
    // Predicated region
    $region30: #{tpu_custom_call.1} parent=1 // pred_check
      _
    $region31: #{tpu_custom_call.1} parent=1 // pred_check_branch
      %73 = sbr.rel (0) target = $region33
    $region32: #{tpu_custom_call.1} parent=1 // pred_region
      %s75 = ssub.s32 1024, 1024
      %76 = vsyncadd [#allocation9], %s75
      %s77 = sshll.u32 [#allocation10], 4
      %s78 = int_to_ptr.vmem [resolvable:$true] %s77
      %83 = dma.hbm_to_vmem [thread:$0]  %s7, 1024, %s78, [#allocation9], 64, 64, 4
    $region33: #{tpu_custom_call.1} parent=1 // pred_fallthru
      _
    // Predicated region
    $region34: #{tpu_custom_call.1} parent=1 // pred_check
      _
    $region35: #{tpu_custom_call.1} parent=1 // pred_check_branch
      %85 = sbr.rel (0) target = $region37
    $region36: #{tpu_custom_call.1} parent=1 // pred_region
      _
    $region37: #{tpu_custom_call.1} parent=1 // pred_fallthru
      _
    // Predicated region
    $region38: #{tpu_custom_call.1} parent=1 // pred_check
      _
    $region39: #{tpu_custom_call.1} parent=1 // pred_check_branch
      %87 = sbr.rel (0) target = $region41
    $region40: #{tpu_custom_call.1} parent=1 // pred_region
      %88 = dma.done [#allocation3], 16384
    $region41: #{tpu_custom_call.1} parent=1 // pred_fallthru
      _
    // Predicated region
    $region42: #{tpu_custom_call.1} parent=1 // pred_check
      _
    $region43: #{tpu_custom_call.1} parent=1 // pred_check_branch
      %90 = sbr.rel (0) target = $region45
    $region44: #{tpu_custom_call.1} parent=1 // pred_region
      %91 = dma.done [#allocation6], 2048
    $region45: #{tpu_custom_call.1} parent=1 // pred_fallthru
      _
    // Predicated region
    $region46: #{tpu_custom_call.1} parent=1 // pred_check
      _
    $region47: #{tpu_custom_call.1} parent=1 // pred_check_branch
      %93 = sbr.rel (0) target = $region49
    $region48: #{tpu_custom_call.1} parent=1 // pred_region
      %94 = dma.done [#allocation6], 1024
    $region49: #{tpu_custom_call.1} parent=1 // pred_fallthru
      _
    // Predicated region
    $region50: #{tpu_custom_call.1} parent=1 // pred_check
      _
    $region51: #{tpu_custom_call.1} parent=1 // pred_check_branch
      %96 = sbr.rel (0) target = $region53
    $region52: #{tpu_custom_call.1} parent=1 // pred_region
      %97 = dma.done [#allocation9], 1024
    $region53: #{tpu_custom_call.1} parent=1 // pred_fallthru
      _
    // Predicated region
    $region54: #{tpu_custom_call.1} parent=1 // pred_check
      _
    $region55: #{tpu_custom_call.1} parent=1 // pred_check_branch
      %99 = sbr.rel (0) target = $region57
    $region56: #{tpu_custom_call.1} parent=1 // pred_region
      %100 = dma.done [#allocation9], 1024
    $region57: #{tpu_custom_call.1} parent=1 // pred_fallthru
      _
    loop: start=0, step=1, limit=4
    $region58: #{tpu_custom_call.1} parent=1 // loop_pre_header
      _
    $region59: #{tpu_custom_call.1} parent=1 // loop_header
      %s103 = sphi 0, %s107
      %p104 = scmp.ge.s32.totalorder %s103, 4
      %v108 = vphi -inf, %v370
      %v109 = vphi -inf, %v371
      %v110 = vphi -inf, %v372
      %v111 = vphi -inf, %v373
      %v112 = vphi -inf, %v374
      %v113 = vphi -inf, %v375
      %v114 = vphi -inf, %v376
      %v115 = vphi -inf, %v377
      %v116 = vphi -inf, %v378
      %v117 = vphi -inf, %v379
      %v118 = vphi -inf, %v380
      %v119 = vphi -inf, %v381
      %v120 = vphi -inf, %v382
      %v121 = vphi -inf, %v383
      %v122 = vphi -inf, %v384
      %v123 = vphi -inf, %v385
      %v124 = vphi -inf, %v386
      %v125 = vphi -inf, %v387
      %v126 = vphi -inf, %v388
      %v127 = vphi -inf, %v389
      %v128 = vphi -inf, %v390
      %v129 = vphi -inf, %v391
      %v130 = vphi -inf, %v392
      %v131 = vphi -inf, %v393
      %v132 = vphi -inf, %v394
      %v133 = vphi -inf, %v395
      %v134 = vphi -inf, %v396
      %v135 = vphi -inf, %v397
      %v136 = vphi -inf, %v398
      %v137 = vphi -inf, %v399
      %v138 = vphi -inf, %v400
      %v139 = vphi -inf, %v401
    $region60: #{tpu_custom_call.1} parent=1 // loop_header_branch
      %106 = sbr.rel (%p104) target = $region64
    $region61: #{tpu_custom_call.1} parent=1 // loop_body
      %s140 = smul.u32 %s103, 8
      %s141 = sshra.s32 %s140, 3
      %s142 = sand.u32 %s140, 7
      %s143 = smul.u32 %s141, 2
      %s144 = smul.addr %s143, 8
      %s145 = scalar_lea.vmem [#allocation2], %s144
      %v146 = vld [vmem:[%s145] sm:$0xff]
      %v147 = vld [vmem:[%s145 + $0x8] sm:$0xff]
      %v148 = vld [vmem:[%s145 + $0x40] sm:$0xff]
      %v149 = vld [vmem:[%s145 + $0x48] sm:$0xff]
      %v150 = vld [vmem:[%s145 + $0x80] sm:$0xff]
      %v151 = vld [vmem:[%s145 + $0x88] sm:$0xff]
      %v152 = vld [vmem:[%s145 + $0xc0] sm:$0xff]
      %v153 = vld [vmem:[%s145 + $0xc8] sm:$0xff]
      %v154 = vld [vmem:[%s145 + $0x100] sm:$0xff]
      %v155 = vld [vmem:[%s145 + $0x108] sm:$0xff]
      %v156 = vld [vmem:[%s145 + $0x140] sm:$0xff]
      %v157 = vld [vmem:[%s145 + $0x148] sm:$0xff]
      %v158 = vld [vmem:[%s145 + $0x180] sm:$0xff]
      %v159 = vld [vmem:[%s145 + $0x188] sm:$0xff]
      %v160 = vld [vmem:[%s145 + $0x1c0] sm:$0xff]
      %v161 = vld [vmem:[%s145 + $0x1c8] sm:$0xff]
      %v162 = vld [vmem:[%s145 + $0x200] sm:$0xff]
      %v163 = vld [vmem:[%s145 + $0x208] sm:$0xff]
      %v164 = vld [vmem:[%s145 + $0x240] sm:$0xff]
      %v165 = vld [vmem:[%s145 + $0x248] sm:$0xff]
      %v166 = vld [vmem:[%s145 + $0x280] sm:$0xff]
      %v167 = vld [vmem:[%s145 + $0x288] sm:$0xff]
      %v168 = vld [vmem:[%s145 + $0x2c0] sm:$0xff]
      %v169 = vld [vmem:[%s145 + $0x2c8] sm:$0xff]
      %v170 = vld [vmem:[%s145 + $0x300] sm:$0xff]
      %v171 = vld [vmem:[%s145 + $0x308] sm:$0xff]
      %v172 = vld [vmem:[%s145 + $0x340] sm:$0xff]
      %v173 = vld [vmem:[%s145 + $0x348] sm:$0xff]
      %v174 = vld [vmem:[%s145 + $0x380] sm:$0xff]
      %v175 = vld [vmem:[%s145 + $0x388] sm:$0xff]
      %v176 = vld [vmem:[%s145 + $0x3c0] sm:$0xff]
      %v177 = vld [vmem:[%s145 + $0x3c8] sm:$0xff]
      %v178 = vrot.slane %v146, 4
      %v179 = vmax.f32 %v146, %v178
      %v180 = vrot.slane %v179, 2
      %v181 = vmax.f32 %v179, %v180
      %v182 = vrot.slane %v181, 1
      %v183 = vmax.f32 %v181, %v182
      %v184 = vrot.slane %v147, 4
      %v185 = vmax.f32 %v147, %v184
      %v186 = vrot.slane %v185, 2
      %v187 = vmax.f32 %v185, %v186
      %v188 = vrot.slane %v187, 1
      %v189 = vmax.f32 %v187, %v188
      %v190 = vrot.slane %v148, 4
      %v191 = vmax.f32 %v148, %v190
      %v192 = vrot.slane %v191, 2
      %v193 = vmax.f32 %v191, %v192
      %v194 = vrot.slane %v193, 1
      %v195 = vmax.f32 %v193, %v194
      %v196 = vrot.slane %v149, 4
      %v197 = vmax.f32 %v149, %v196
      %v198 = vrot.slane %v197, 2
      %v199 = vmax.f32 %v197, %v198
      %v200 = vrot.slane %v199, 1
      %v201 = vmax.f32 %v199, %v200
      %v202 = vrot.slane %v150, 4
      %v203 = vmax.f32 %v150, %v202
      %v204 = vrot.slane %v203, 2
      %v205 = vmax.f32 %v203, %v204
      %v206 = vrot.slane %v205, 1
      %v207 = vmax.f32 %v205, %v206
      %v208 = vrot.slane %v151, 4
      %v209 = vmax.f32 %v151, %v208
      %v210 = vrot.slane %v209, 2
      %v211 = vmax.f32 %v209, %v210
      %v212 = vrot.slane %v211, 1
      %v213 = vmax.f32 %v211, %v212
      %v214 = vrot.slane %v152, 4
      %v215 = vmax.f32 %v152, %v214
      %v216 = vrot.slane %v215, 2
      %v217 = vmax.f32 %v215, %v216
      %v218 = vrot.slane %v217, 1
      %v219 = vmax.f32 %v217, %v218
      %v220 = vrot.slane %v153, 4
      %v221 = vmax.f32 %v153, %v220
      %v222 = vrot.slane %v221, 2
      %v223 = vmax.f32 %v221, %v222
      %v224 = vrot.slane %v223, 1
      %v225 = vmax.f32 %v223, %v224
      %v226 = vrot.slane %v154, 4
      %v227 = vmax.f32 %v154, %v226
      %v228 = vrot.slane %v227, 2
      %v229 = vmax.f32 %v227, %v228
      %v230 = vrot.slane %v229, 1
      %v231 = vmax.f32 %v229, %v230
      %v232 = vrot.slane %v155, 4
      %v233 = vmax.f32 %v155, %v232
      %v234 = vrot.slane %v233, 2
      %v235 = vmax.f32 %v233, %v234
      %v236 = vrot.slane %v235, 1
      %v237 = vmax.f32 %v235, %v236
      %v238 = vrot.slane %v156, 4
      %v239 = vmax.f32 %v156, %v238
      %v240 = vrot.slane %v239, 2
      %v241 = vmax.f32 %v239, %v240
      %v242 = vrot.slane %v241, 1
      %v243 = vmax.f32 %v241, %v242
      %v244 = vrot.slane %v157, 4
      %v245 = vmax.f32 %v157, %v244
      %v246 = vrot.slane %v245, 2
      %v247 = vmax.f32 %v245, %v246
      %v248 = vrot.slane %v247, 1
      %v249 = vmax.f32 %v247, %v248
      %v250 = vrot.slane %v158, 4
      %v251 = vmax.f32 %v158, %v250
      %v252 = vrot.slane %v251, 2
      %v253 = vmax.f32 %v251, %v252
      %v254 = vrot.slane %v253, 1
      %v255 = vmax.f32 %v253, %v254
      %v256 = vrot.slane %v159, 4
      %v257 = vmax.f32 %v159, %v256
      %v258 = vrot.slane %v257, 2
      %v259 = vmax.f32 %v257, %v258
      %v260 = vrot.slane %v259, 1
      %v261 = vmax.f32 %v259, %v260
      %v262 = vrot.slane %v160, 4
      %v263 = vmax.f32 %v160, %v262
      %v264 = vrot.slane %v263, 2
      %v265 = vmax.f32 %v263, %v264
      %v266 = vrot.slane %v265, 1
      %v267 = vmax.f32 %v265, %v266
      %v268 = vrot.slane %v161, 4
      %v269 = vmax.f32 %v161, %v268
      %v270 = vrot.slane %v269, 2
      %v271 = vmax.f32 %v269, %v270
      %v272 = vrot.slane %v271, 1
      %v273 = vmax.f32 %v271, %v272
      %v274 = vrot.slane %v162, 4
      %v275 = vmax.f32 %v162, %v274
      %v276 = vrot.slane %v275, 2
      %v277 = vmax.f32 %v275, %v276
      %v278 = vrot.slane %v277, 1
      %v279 = vmax.f32 %v277, %v278
      %v280 = vrot.slane %v163, 4
      %v281 = vmax.f32 %v163, %v280
      %v282 = vrot.slane %v281, 2
      %v283 = vmax.f32 %v281, %v282
      %v284 = vrot.slane %v283, 1
      %v285 = vmax.f32 %v283, %v284
      %v286 = vrot.slane %v164, 4
      %v287 = vmax.f32 %v164, %v286
      %v288 = vrot.slane %v287, 2
      %v289 = vmax.f32 %v287, %v288
      %v290 = vrot.slane %v289, 1
      %v291 = vmax.f32 %v289, %v290
      %v292 = vrot.slane %v165, 4
      %v293 = vmax.f32 %v165, %v292
      %v294 = vrot.slane %v293, 2
      %v295 = vmax.f32 %v293, %v294
      %v296 = vrot.slane %v295, 1
      %v297 = vmax.f32 %v295, %v296
      %v298 = vrot.slane %v166, 4
      %v299 = vmax.f32 %v166, %v298
      %v300 = vrot.slane %v299, 2
      %v301 = vmax.f32 %v299, %v300
      %v302 = vrot.slane %v301, 1
      %v303 = vmax.f32 %v301, %v302
      %v304 = vrot.slane %v167, 4
      %v305 = vmax.f32 %v167, %v304
      %v306 = vrot.slane %v305, 2
      %v307 = vmax.f32 %v305, %v306
      %v308 = vrot.slane %v307, 1
      %v309 = vmax.f32 %v307, %v308
      %v310 = vrot.slane %v168, 4
      %v311 = vmax.f32 %v168, %v310
      %v312 = vrot.slane %v311, 2
      %v313 = vmax.f32 %v311, %v312
      %v314 = vrot.slane %v313, 1
      %v315 = vmax.f32 %v313, %v314
      %v316 = vrot.slane %v169, 4
      %v317 = vmax.f32 %v169, %v316
      %v318 = vrot.slane %v317, 2
      %v319 = vmax.f32 %v317, %v318
      %v320 = vrot.slane %v319, 1
      %v321 = vmax.f32 %v319, %v320
      %v322 = vrot.slane %v170, 4
      %v323 = vmax.f32 %v170, %v322
      %v324 = vrot.slane %v323, 2
      %v325 = vmax.f32 %v323, %v324
      %v326 = vrot.slane %v325, 1
      %v327 = vmax.f32 %v325, %v326
      %v328 = vrot.slane %v171, 4
      %v329 = vmax.f32 %v171, %v328
      %v330 = vrot.slane %v329, 2
      %v331 = vmax.f32 %v329, %v330
      %v332 = vrot.slane %v331, 1
      %v333 = vmax.f32 %v331, %v332
      %v334 = vrot.slane %v172, 4
      %v335 = vmax.f32 %v172, %v334
      %v336 = vrot.slane %v335, 2
      %v337 = vmax.f32 %v335, %v336
      %v338 = vrot.slane %v337, 1
      %v339 = vmax.f32 %v337, %v338
      %v340 = vrot.slane %v173, 4
      %v341 = vmax.f32 %v173, %v340
      %v342 = vrot.slane %v341, 2
      %v343 = vmax.f32 %v341, %v342
      %v344 = vrot.slane %v343, 1
      %v345 = vmax.f32 %v343, %v344
      %v346 = vrot.slane %v174, 4
      %v347 = vmax.f32 %v174, %v346
      %v348 = vrot.slane %v347, 2
      %v349 = vmax.f32 %v347, %v348
      %v350 = vrot.slane %v349, 1
      %v351 = vmax.f32 %v349, %v350
      %v352 = vrot.slane %v175, 4
      %v353 = vmax.f32 %v175, %v352
      %v354 = vrot.slane %v353, 2
      %v355 = vmax.f32 %v353, %v354
      %v356 = vrot.slane %v355, 1
      %v357 = vmax.f32 %v355, %v356
      %v358 = vrot.slane %v176, 4
      %v359 = vmax.f32 %v176, %v358
      %v360 = vrot.slane %v359, 2
      %v361 = vmax.f32 %v359, %v360
      %v362 = vrot.slane %v361, 1
      %v363 = vmax.f32 %v361, %v362
      %v364 = vrot.slane %v177, 4
      %v365 = vmax.f32 %v177, %v364
      %v366 = vrot.slane %v365, 2
      %v367 = vmax.f32 %v365, %v366
      %v368 = vrot.slane %v367, 1
      %v369 = vmax.f32 %v367, %v368
      %v370 = vmax.f32 %v108, %v183
      %v371 = vmax.f32 %v109, %v189
      %v372 = vmax.f32 %v110, %v195
      %v373 = vmax.f32 %v111, %v201
      %v374 = vmax.f32 %v112, %v207
      %v375 = vmax.f32 %v113, %v213
      %v376 = vmax.f32 %v114, %v219
      %v377 = vmax.f32 %v115, %v225
      %v378 = vmax.f32 %v116, %v231
      %v379 = vmax.f32 %v117, %v237
      %v380 = vmax.f32 %v118, %v243
      %v381 = vmax.f32 %v119, %v249
      %v382 = vmax.f32 %v120, %v255
      %v383 = vmax.f32 %v121, %v261
      %v384 = vmax.f32 %v122, %v267
      %v385 = vmax.f32 %v123, %v273
      %v386 = vmax.f32 %v124, %v279
      %v387 = vmax.f32 %v125, %v285
      %v388 = vmax.f32 %v126, %v291
      %v389 = vmax.f32 %v127, %v297
      %v390 = vmax.f32 %v128, %v303
      %v391 = vmax.f32 %v129, %v309
      %v392 = vmax.f32 %v130, %v315
      %v393 = vmax.f32 %v131, %v321
      %v394 = vmax.f32 %v132, %v327
      %v395 = vmax.f32 %v133, %v333
      %v396 = vmax.f32 %v134, %v339
      %v397 = vmax.f32 %v135, %v345
      %v398 = vmax.f32 %v136, %v351
      %v399 = vmax.f32 %v137, %v357
      %v400 = vmax.f32 %v138, %v363
      %v401 = vmax.f32 %v139, %v369
    $region62: #{tpu_custom_call.1} parent=1 // loop_footer
      %s107 = sadd.s32 1, %s103
    $region63: #{tpu_custom_call.1} parent=1 // loop_footer_branch
      %102 = sbr.rel target = $region59
    $region64: #{tpu_custom_call.1} parent=1 // loop_exit
      _
    %v402 = vpack.c.bf16 %v108, %v108
    %v403 = vpack.c.bf16 %v109, %v109
    %v404 = vpack.c.bf16 %v110, %v110
    %v405 = vpack.c.bf16 %v111, %v111
    %v406 = vpack.c.bf16 %v112, %v112
    %v407 = vpack.c.bf16 %v113, %v113
    %v408 = vpack.c.bf16 %v114, %v114
    %v409 = vpack.c.bf16 %v115, %v115
    %v410 = vpack.c.bf16 %v116, %v116
    %v411 = vpack.c.bf16 %v117, %v117
    %v412 = vpack.c.bf16 %v118, %v118
    %v413 = vpack.c.bf16 %v119, %v119
    %v414 = vpack.c.bf16 %v120, %v120
    %v415 = vpack.c.bf16 %v121, %v121
    %v416 = vpack.c.bf16 %v122, %v122
    %v417 = vpack.c.bf16 %v123, %v123
    %v418 = vpack.c.bf16 %v124, %v124
    %v419 = vpack.c.bf16 %v125, %v125
    %v420 = vpack.c.bf16 %v126, %v126
    %v421 = vpack.c.bf16 %v127, %v127
    %v422 = vpack.c.bf16 %v128, %v128
    %v423 = vpack.c.bf16 %v129, %v129
    %v424 = vpack.c.bf16 %v130, %v130
    %v425 = vpack.c.bf16 %v131, %v131
    %v426 = vpack.c.bf16 %v132, %v132
    %v427 = vpack.c.bf16 %v133, %v133
    %v428 = vpack.c.bf16 %v134, %v134
    %v429 = vpack.c.bf16 %v135, %v135
    %v430 = vpack.c.bf16 %v136, %v136
    %v431 = vpack.c.bf16 %v137, %v137
    %v432 = vpack.c.bf16 %v138, %v138
    %v433 = vpack.c.bf16 %v139, %v139
    %v434 = vld [vmem:[#allocation5] sm:$0xf]
    %v435 = vld [vmem:[#allocation5 + $0x4] sm:$0xf]
    %v436 = vld [vmem:[#allocation5 + $0x8] sm:$0xf]
    %v437 = vld [vmem:[#allocation5 + $0xc] sm:$0xf]
    %v438 = vld [vmem:[#allocation5 + $0x10] sm:$0xf]
    %v439 = vld [vmem:[#allocation5 + $0x14] sm:$0xf]
    %v440 = vld [vmem:[#allocation5 + $0x18] sm:$0xf]
    %v441 = vld [vmem:[#allocation5 + $0x1c] sm:$0xf]
    %v442 = vld [vmem:[#allocation5 + $0x20] sm:$0xf]
    %v443 = vld [vmem:[#allocation5 + $0x24] sm:$0xf]
    %v444 = vld [vmem:[#allocation5 + $0x28] sm:$0xf]
    %v445 = vld [vmem:[#allocation5 + $0x2c] sm:$0xf]
    %v446 = vld [vmem:[#allocation5 + $0x30] sm:$0xf]
    %v447 = vld [vmem:[#allocation5 + $0x34] sm:$0xf]
    %v448 = vld [vmem:[#allocation5 + $0x38] sm:$0xf]
    %v449 = vld [vmem:[#allocation5 + $0x3c] sm:$0xf]
    %v450 = vld [vmem:[#allocation5 + $0x40] sm:$0xf]
    %v451 = vld [vmem:[#allocation5 + $0x44] sm:$0xf]
    %v452 = vld [vmem:[#allocation5 + $0x48] sm:$0xf]
    %v453 = vld [vmem:[#allocation5 + $0x4c] sm:$0xf]
    %v454 = vld [vmem:[#allocation5 + $0x50] sm:$0xf]
    %v455 = vld [vmem:[#allocation5 + $0x54] sm:$0xf]
    %v456 = vld [vmem:[#allocation5 + $0x58] sm:$0xf]
    %v457 = vld [vmem:[#allocation5 + $0x5c] sm:$0xf]
    %v458 = vld [vmem:[#allocation5 + $0x60] sm:$0xf]
    %v459 = vld [vmem:[#allocation5 + $0x64] sm:$0xf]
    %v460 = vld [vmem:[#allocation5 + $0x68] sm:$0xf]
    %v461 = vld [vmem:[#allocation5 + $0x6c] sm:$0xf]
    %v462 = vld [vmem:[#allocation5 + $0x70] sm:$0xf]
    %v463 = vld [vmem:[#allocation5 + $0x74] sm:$0xf]
    %v464 = vld [vmem:[#allocation5 + $0x78] sm:$0xf]
    %v465 = vld [vmem:[#allocation5 + $0x7c] sm:$0xf]
    %v466 = vld [vmem:[%s2] sm:$0x1]
    %v468 = vlaneseq
    %v469 = vshrl.u32 %v468, 7
    %v470 = vsub.s32 0, %v469
    %v471 = vrot.slane %v466, %v470
    %v505 = vunpack.c.l.b16 %v402
    %v506 = vunpack.c.l.b16 %v403
    %v507 = vunpack.c.l.b16 %v404
    %v508 = vunpack.c.l.b16 %v405
    %v509 = vunpack.c.l.b16 %v406
    %v510 = vunpack.c.l.b16 %v407
    %v511 = vunpack.c.l.b16 %v408
    %v512 = vunpack.c.l.b16 %v409
    %v513 = vunpack.c.l.b16 %v410
    %v514 = vunpack.c.l.b16 %v411
    %v515 = vunpack.c.l.b16 %v412
    %v516 = vunpack.c.l.b16 %v413
    %v517 = vunpack.c.l.b16 %v414
    %v518 = vunpack.c.l.b16 %v415
    %v519 = vunpack.c.l.b16 %v416
    %v520 = vunpack.c.l.b16 %v417
    %v521 = vunpack.c.l.b16 %v418
    %v522 = vunpack.c.l.b16 %v419
    %v523 = vunpack.c.l.b16 %v420
    %v524 = vunpack.c.l.b16 %v421
    %v525 = vunpack.c.l.b16 %v422
    %v526 = vunpack.c.l.b16 %v423
    %v527 = vunpack.c.l.b16 %v424
    %v528 = vunpack.c.l.b16 %v425
    %v529 = vunpack.c.l.b16 %v426
    %v530 = vunpack.c.l.b16 %v427
    %v531 = vunpack.c.l.b16 %v428
    %v532 = vunpack.c.l.b16 %v429
    %v533 = vunpack.c.l.b16 %v430
    %v534 = vunpack.c.l.b16 %v431
    %v535 = vunpack.c.l.b16 %v432
    %v536 = vunpack.c.l.b16 %v433
    %vm537 = vcmask 1041409
    %v538 = vsel %vm537, %v507, %v505
    %vm539 = vcmask 1042434
    %v540 = vsel %vm539, %v509, %v538
    %vm541 = vcmask 1043459
    %v542 = vsel %vm541, %v511, %v540
    %vm543 = vcmask 1044484
    %v544 = vsel %vm543, %v513, %v542
    %vm545 = vcmask 1045509
    %v546 = vsel %vm545, %v515, %v544
    %vm547 = vcmask 1046534
    %v548 = vsel %vm547, %v517, %v546
    %vm549 = vcmask 1047559
    %v550 = vsel %vm549, %v519, %v548
    %v551 = vsel %vm537, %v508, %v506
    %v552 = vsel %vm539, %v510, %v551
    %v553 = vsel %vm541, %v512, %v552
    %v554 = vsel %vm543, %v514, %v553
    %v555 = vsel %vm545, %v516, %v554
    %v556 = vsel %vm547, %v518, %v555
    %v557 = vsel %vm549, %v520, %v556
    %v558 = vsel %vm537, %v523, %v521
    %v559 = vsel %vm539, %v525, %v558
    %v560 = vsel %vm541, %v527, %v559
    %v561 = vsel %vm543, %v529, %v560
    %v562 = vsel %vm545, %v531, %v561
    %v563 = vsel %vm547, %v533, %v562
    %v564 = vsel %vm549, %v535, %v563
    %v565 = vsel %vm537, %v524, %v522
    %v566 = vsel %vm539, %v526, %v565
    %v567 = vsel %vm541, %v528, %v566
    %v568 = vsel %vm543, %v530, %v567
    %v569 = vsel %vm545, %v532, %v568
    %v570 = vsel %vm547, %v534, %v569
    %v571 = vsel %vm549, %v536, %v570
    %v572 = vpack.c.b16 %v564, %v550
    %v573 = vpack.c.b16 %v571, %v557
    %v608 = vunpack.c.l.b16 %v434
    %v609 = vunpack.c.l.b16 %v435
    %v610 = vunpack.c.l.b16 %v436
    %v611 = vunpack.c.l.b16 %v437
    %v612 = vunpack.c.l.b16 %v438
    %v613 = vunpack.c.l.b16 %v439
    %v614 = vunpack.c.l.b16 %v440
    %v615 = vunpack.c.l.b16 %v441
    %v616 = vunpack.c.l.b16 %v442
    %v617 = vunpack.c.l.b16 %v443
    %v618 = vunpack.c.l.b16 %v444
    %v619 = vunpack.c.l.b16 %v445
    %v620 = vunpack.c.l.b16 %v446
    %v621 = vunpack.c.l.b16 %v447
    %v622 = vunpack.c.l.b16 %v448
    %v623 = vunpack.c.l.b16 %v449
    %v624 = vunpack.c.l.b16 %v450
    %v625 = vunpack.c.l.b16 %v451
    %v626 = vunpack.c.l.b16 %v452
    %v627 = vunpack.c.l.b16 %v453
    %v628 = vunpack.c.l.b16 %v454
    %v629 = vunpack.c.l.b16 %v455
    %v630 = vunpack.c.l.b16 %v456
    %v631 = vunpack.c.l.b16 %v457
    %v632 = vunpack.c.l.b16 %v458
    %v633 = vunpack.c.l.b16 %v459
    %v634 = vunpack.c.l.b16 %v460
    %v635 = vunpack.c.l.b16 %v461
    %v636 = vunpack.c.l.b16 %v462
    %v637 = vunpack.c.l.b16 %v463
    %v638 = vunpack.c.l.b16 %v464
    %v639 = vunpack.c.l.b16 %v465
    %v640 = vpack.c.b16 %v609, %v608
    %v641 = vpack.c.b16 %v611, %v610
    %v642 = vpack.c.b16 %v613, %v612
    %v643 = vpack.c.b16 %v615, %v614
    %v644 = vpack.c.b16 %v617, %v616
    %v645 = vpack.c.b16 %v619, %v618
    %v646 = vpack.c.b16 %v621, %v620
    %v647 = vpack.c.b16 %v623, %v622
    %v648 = vpack.c.b16 %v625, %v624
    %v649 = vpack.c.b16 %v627, %v626
    %v650 = vpack.c.b16 %v629, %v628
    %v651 = vpack.c.b16 %v631, %v630
    %v652 = vpack.c.b16 %v633, %v632
    %v653 = vpack.c.b16 %v635, %v634
    %v654 = vpack.c.b16 %v637, %v636
    %v655 = vpack.c.b16 %v639, %v638
    %672 = vmatprep.subr.bf16.mxu0 0
    %673 = vmatpush1.bf16.msra.mxu0 %v647
    %674 = vmatprep.subr.bf16.mxu0 0
    %675 = vmatpush1.bf16.msra.mxu0 %v646
    %676 = vmatprep.subr.bf16.mxu0 0
    %677 = vmatpush1.bf16.msra.mxu0 %v645
    %678 = vmatprep.subr.bf16.mxu0 0
    %679 = vmatpush1.bf16.msra.mxu0 %v644
    %680 = vmatprep.subr.bf16.mxu0 0
    %681 = vmatpush1.bf16.msra.mxu0 %v643
    %682 = vmatprep.subr.bf16.mxu0 0
    %683 = vmatpush1.bf16.msra.mxu0 %v642
    %684 = vmatprep.subr.bf16.mxu0 0
    %685 = vmatpush1.bf16.msra.mxu0 %v641
    %686 = vmatprep.subr.bf16.mxu0 0
    %687 = vmatpush1.bf16.msra.mxu0 %v640
    %688 = vmatprep.subr.bf16.mxu0 0
    %689 = vmatpush2.bf16.msra.mxu0 %v655
    %690 = vmatprep.subr.bf16.mxu0 0
    %691 = vmatpush2.bf16.msra.mxu0 %v654
    %692 = vmatprep.subr.bf16.mxu0 0
    %693 = vmatpush2.bf16.msra.mxu0 %v653
    %694 = vmatprep.subr.bf16.mxu0 0
    %695 = vmatpush2.bf16.msra.mxu0 %v652
    %696 = vmatprep.subr.bf16.mxu0 0
    %697 = vmatpush2.bf16.msra.mxu0 %v651
    %698 = vmatprep.subr.bf16.mxu0 0
    %699 = vmatpush2.bf16.msra.mxu0 %v650
    %700 = vmatprep.subr.bf16.mxu0 0
    %701 = vmatpush2.bf16.msra.mxu0 %v649
    %702 = vmatprep.subr.bf16.mxu0 0
    %703 = vmatpush2.bf16.msra.mxu0 %v648
    %704 = vmatprep.mubr.bf16.mxu0 %v573
    %705 = vmatmul.mubr.bf16.gmra.mxu0 %v572
    %v706 = vpop.f32.mrf.mxu0
    %v707 = vadd.f32 %v471, %v706
    %v708 = vpop.f32.mrf.mxu0
    %v709 = vpop.f32.mrf.mxu0
    %v710 = vadd.f32 %v471, %v709
    %v711 = vpop.f32.mrf.mxu0
    %712 = vdwg.mxu0
    %v713 = vmax.f32 %v707, 0.0
    %v714 = vmax.f32 %v710, 0.0
    %v715 = vpack.c.bf16 %v714, %v713
    %v716 = vld [vmem:[#allocation7] sm:$0xf]
    %v717 = vld [vmem:[#allocation7 + $0x4] sm:$0xf]
    %v718 = vld [vmem:[#allocation7 + $0x8] sm:$0xf]
    %v719 = vld [vmem:[#allocation7 + $0xc] sm:$0xf]
    %v720 = vld [vmem:[#allocation7 + $0x10] sm:$0xf]
    %v721 = vld [vmem:[#allocation7 + $0x14] sm:$0xf]
    %v722 = vld [vmem:[#allocation7 + $0x18] sm:$0xf]
    %v723 = vld [vmem:[#allocation7 + $0x1c] sm:$0xf]
    %v724 = vld [vmem:[#allocation7 + $0x20] sm:$0xf]
    %v725 = vld [vmem:[#allocation7 + $0x24] sm:$0xf]
    %v726 = vld [vmem:[#allocation7 + $0x28] sm:$0xf]
    %v727 = vld [vmem:[#allocation7 + $0x2c] sm:$0xf]
    %v728 = vld [vmem:[#allocation7 + $0x30] sm:$0xf]
    %v729 = vld [vmem:[#allocation7 + $0x34] sm:$0xf]
    %v730 = vld [vmem:[#allocation7 + $0x38] sm:$0xf]
    %v731 = vld [vmem:[#allocation7 + $0x3c] sm:$0xf]
    %v732 = vld [vmem:[%s4] sm:$0x1]
    %v734 = vlaneseq
    %v735 = vshrl.u32 %v734, 7
    %v736 = vsub.s32 0, %v735
    %v737 = vrot.slane %v732, %v736
    %v755 = vunpack.c.l.b16 %v716
    %v756 = vunpack.c.l.b16 %v717
    %v757 = vunpack.c.l.b16 %v718
    %v758 = vunpack.c.l.b16 %v719
    %v759 = vunpack.c.l.b16 %v720
    %v760 = vunpack.c.l.b16 %v721
    %v761 = vunpack.c.l.b16 %v722
    %v762 = vunpack.c.l.b16 %v723
    %v763 = vunpack.c.l.b16 %v724
    %v764 = vunpack.c.l.b16 %v725
    %v765 = vunpack.c.l.b16 %v726
    %v766 = vunpack.c.l.b16 %v727
    %v767 = vunpack.c.l.b16 %v728
    %v768 = vunpack.c.l.b16 %v729
    %v769 = vunpack.c.l.b16 %v730
    %v770 = vunpack.c.l.b16 %v731
    %v771 = vpack.c.b16 %v756, %v755
    %v772 = vpack.c.b16 %v758, %v757
    %v773 = vpack.c.b16 %v760, %v759
    %v774 = vpack.c.b16 %v762, %v761
    %v775 = vpack.c.b16 %v764, %v763
    %v776 = vpack.c.b16 %v766, %v765
    %v777 = vpack.c.b16 %v768, %v767
    %v778 = vpack.c.b16 %v770, %v769
    %787 = vmatprep.subr.bf16.mxu0 0
    %788 = vmatpush1.bf16.msra.mxu0 %v778
    %789 = vmatprep.subr.bf16.mxu0 0
    %790 = vmatpush1.bf16.msra.mxu0 %v777
    %791 = vmatprep.subr.bf16.mxu0 0
    %792 = vmatpush1.bf16.msra.mxu0 %v776
    %793 = vmatprep.subr.bf16.mxu0 0
    %794 = vmatpush1.bf16.msra.mxu0 %v775
    %795 = vmatprep.subr.bf16.mxu0 0
    %796 = vmatpush1.bf16.msra.mxu0 %v774
    %797 = vmatprep.subr.bf16.mxu0 0
    %798 = vmatpush1.bf16.msra.mxu0 %v773
    %799 = vmatprep.subr.bf16.mxu0 0
    %800 = vmatpush1.bf16.msra.mxu0 %v772
    %801 = vmatprep.subr.bf16.mxu0 0
    %802 = vmatpush1.bf16.msra.mxu0 %v771
    %803 = vmatprep.subr.bf16.mxu0 0
    %804 = vmatpush2.bf16.msra.mxu0 0
    %805 = vmatprep.subr.bf16.mxu0 0
    %806 = vmatpush2.bf16.msra.mxu0 0
    %807 = vmatprep.subr.bf16.mxu0 0
    %808 = vmatpush2.bf16.msra.mxu0 0
    %809 = vmatprep.subr.bf16.mxu0 0
    %810 = vmatpush2.bf16.msra.mxu0 0
    %811 = vmatprep.subr.bf16.mxu0 0
    %812 = vmatpush2.bf16.msra.mxu0 0
    %813 = vmatprep.subr.bf16.mxu0 0
    %814 = vmatpush2.bf16.msra.mxu0 0
    %815 = vmatprep.subr.bf16.mxu0 0
    %816 = vmatpush2.bf16.msra.mxu0 0
    %817 = vmatprep.subr.bf16.mxu0 0
    %818 = vmatpush2.bf16.msra.mxu0 0
    %819 = vmatprep.mubr.bf16.mxu0 0
    %820 = vmatmul.mubr.bf16.gmra.mxu0 %v715
    %v821 = vpop.f32.mrf.mxu0
    %v822 = vadd.f32 %v737, %v821
    %v823 = vpop.f32.mrf.mxu0
    %v824 = vpop.f32.mrf.mxu0
    %v825 = vadd.f32 %v737, %v824
    %v826 = vpop.f32.mrf.mxu0
    %827 = vdwg.mxu0
    %v828 = vmax.f32 %v822, 0.0
    %v829 = vmax.f32 %v825, 0.0
    %v830 = vpack.c.bf16 %v829, %v828
    %v831 = vld [vmem:[#allocation8] sm:$0xf]
    %v832 = vld [vmem:[#allocation8 + $0x4] sm:$0xf]
    %v833 = vld [vmem:[#allocation8 + $0x8] sm:$0xf]
    %v834 = vld [vmem:[#allocation8 + $0xc] sm:$0xf]
    %v835 = vld [vmem:[#allocation8 + $0x10] sm:$0xf]
    %v836 = vld [vmem:[#allocation8 + $0x14] sm:$0xf]
    %v837 = vld [vmem:[#allocation8 + $0x18] sm:$0xf]
    %v838 = vld [vmem:[#allocation8 + $0x1c] sm:$0xf]
    %v839 = vld [vmem:[#allocation8 + $0x20] sm:$0xf]
    %v840 = vld [vmem:[#allocation8 + $0x24] sm:$0xf]
    %v841 = vld [vmem:[#allocation8 + $0x28] sm:$0xf]
    %v842 = vld [vmem:[#allocation8 + $0x2c] sm:$0xf]
    %v843 = vld [vmem:[#allocation8 + $0x30] sm:$0xf]
    %v844 = vld [vmem:[#allocation8 + $0x34] sm:$0xf]
    %v845 = vld [vmem:[#allocation8 + $0x38] sm:$0xf]
    %v846 = vld [vmem:[#allocation8 + $0x3c] sm:$0xf]
    %v847 = vld [vmem:[%s6] sm:$0x1]
    %v849 = vlaneseq
    %v850 = vshrl.u32 %v849, 7
    %v851 = vsub.s32 0, %v850
    %v852 = vrot.slane %v847, %v851
    %v870 = vunpack.c.l.b16 %v831
    %v871 = vunpack.c.l.b16 %v832
    %v872 = vunpack.c.l.b16 %v833
    %v873 = vunpack.c.l.b16 %v834
    %v874 = vunpack.c.l.b16 %v835
    %v875 = vunpack.c.l.b16 %v836
    %v876 = vunpack.c.l.b16 %v837
    %v877 = vunpack.c.l.b16 %v838
    %v878 = vunpack.c.l.b16 %v839
    %v879 = vunpack.c.l.b16 %v840
    %v880 = vunpack.c.l.b16 %v841
    %v881 = vunpack.c.l.b16 %v842
    %v882 = vunpack.c.l.b16 %v843
    %v883 = vunpack.c.l.b16 %v844
    %v884 = vunpack.c.l.b16 %v845
    %v885 = vunpack.c.l.b16 %v846
    %v886 = vpack.c.b16 %v871, %v870
    %v887 = vpack.c.b16 %v873, %v872
    %v888 = vpack.c.b16 %v875, %v874
    %v889 = vpack.c.b16 %v877, %v876
    %v890 = vpack.c.b16 %v879, %v878
    %v891 = vpack.c.b16 %v881, %v880
    %v892 = vpack.c.b16 %v883, %v882
    %v893 = vpack.c.b16 %v885, %v884
    %902 = vmatprep.subr.bf16.mxu0 0
    %903 = vmatpush1.bf16.msra.mxu0 %v893
    %904 = vmatprep.subr.bf16.mxu0 0
    %905 = vmatpush1.bf16.msra.mxu0 %v892
    %906 = vmatprep.subr.bf16.mxu0 0
    %907 = vmatpush1.bf16.msra.mxu0 %v891
    %908 = vmatprep.subr.bf16.mxu0 0
    %909 = vmatpush1.bf16.msra.mxu0 %v890
    %910 = vmatprep.subr.bf16.mxu0 0
    %911 = vmatpush1.bf16.msra.mxu0 %v889
    %912 = vmatprep.subr.bf16.mxu0 0
    %913 = vmatpush1.bf16.msra.mxu0 %v888
    %914 = vmatprep.subr.bf16.mxu0 0
    %915 = vmatpush1.bf16.msra.mxu0 %v887
    %916 = vmatprep.subr.bf16.mxu0 0
    %917 = vmatpush1.bf16.msra.mxu0 %v886
    %918 = vmatprep.subr.bf16.mxu0 0
    %919 = vmatpush2.bf16.msra.mxu0 0
    %920 = vmatprep.subr.bf16.mxu0 0
    %921 = vmatpush2.bf16.msra.mxu0 0
    %922 = vmatprep.subr.bf16.mxu0 0
    %923 = vmatpush2.bf16.msra.mxu0 0
    %924 = vmatprep.subr.bf16.mxu0 0
    %925 = vmatpush2.bf16.msra.mxu0 0
    %926 = vmatprep.subr.bf16.mxu0 0
    %927 = vmatpush2.bf16.msra.mxu0 0
    %928 = vmatprep.subr.bf16.mxu0 0
    %929 = vmatpush2.bf16.msra.mxu0 0
    %930 = vmatprep.subr.bf16.mxu0 0
    %931 = vmatpush2.bf16.msra.mxu0 0
    %932 = vmatprep.subr.bf16.mxu0 0
    %933 = vmatpush2.bf16.msra.mxu0 0
    %934 = vmatprep.mubr.bf16.mxu0 0
    %935 = vmatmul.mubr.bf16.gmra.mxu0 %v830
    %v936 = vpop.f32.mrf.mxu0
    %v937 = vadd.f32 %v852, %v936
    %v938 = vpop.f32.mrf.mxu0
    %v939 = vpop.f32.mrf.mxu0
    %v940 = vadd.f32 %v852, %v939
    %v941 = vpop.f32.mrf.mxu0
    %942 = vdwg.mxu0
    %v943 = vmax.f32 %v937, 0.0
    %v944 = vmax.f32 %v940, 0.0
    %v945 = vpack.c.bf16 %v944, %v943
    %v946 = vld [vmem:[#allocation10] sm:$0xf]
    %v947 = vld [vmem:[#allocation10 + $0x4] sm:$0xf]
    %v948 = vld [vmem:[#allocation10 + $0x8] sm:$0xf]
    %v949 = vld [vmem:[#allocation10 + $0xc] sm:$0xf]
    %v950 = vld [vmem:[#allocation10 + $0x10] sm:$0xf]
    %v951 = vld [vmem:[#allocation10 + $0x14] sm:$0xf]
    %v952 = vld [vmem:[#allocation10 + $0x18] sm:$0xf]
    %v953 = vld [vmem:[#allocation10 + $0x1c] sm:$0xf]
    %v954 = vld [vmem:[#allocation10 + $0x20] sm:$0xf]
    %v955 = vld [vmem:[#allocation10 + $0x24] sm:$0xf]
    %v956 = vld [vmem:[#allocation10 + $0x28] sm:$0xf]
    %v957 = vld [vmem:[#allocation10 + $0x2c] sm:$0xf]
    %v958 = vld [vmem:[#allocation10 + $0x30] sm:$0xf]
    %v959 = vld [vmem:[#allocation10 + $0x34] sm:$0xf]
    %v960 = vld [vmem:[#allocation10 + $0x38] sm:$0xf]
    %v961 = vld [vmem:[#allocation10 + $0x3c] sm:$0xf]
    %v962 = vld [vmem:[%s8] sm:$0x1]
    %v964 = vlaneseq
    %v965 = vshrl.u32 %v964, 7
    %v966 = vsub.s32 0, %v965
    %v967 = vrot.slane %v962, %v966
    %v985 = vunpack.c.l.b16 %v946
    %v986 = vunpack.c.l.b16 %v947
    %v987 = vunpack.c.l.b16 %v948
    %v988 = vunpack.c.l.b16 %v949
    %v989 = vunpack.c.l.b16 %v950
    %v990 = vunpack.c.l.b16 %v951
    %v991 = vunpack.c.l.b16 %v952
    %v992 = vunpack.c.l.b16 %v953
    %v993 = vunpack.c.l.b16 %v954
    %v994 = vunpack.c.l.b16 %v955
    %v995 = vunpack.c.l.b16 %v956
    %v996 = vunpack.c.l.b16 %v957
    %v997 = vunpack.c.l.b16 %v958
    %v998 = vunpack.c.l.b16 %v959
    %v999 = vunpack.c.l.b16 %v960
    %v1000 = vunpack.c.l.b16 %v961
    %v1001 = vpack.c.b16 %v986, %v985
    %v1002 = vpack.c.b16 %v988, %v987
    %v1003 = vpack.c.b16 %v990, %v989
    %v1004 = vpack.c.b16 %v992, %v991
    %v1005 = vpack.c.b16 %v994, %v993
    %v1006 = vpack.c.b16 %v996, %v995
    %v1007 = vpack.c.b16 %v998, %v997
    %v1008 = vpack.c.b16 %v1000, %v999
    %1017 = vmatprep.subr.bf16.mxu0 0
    %1018 = vmatpush1.bf16.msra.mxu0 %v1008
    %1019 = vmatprep.subr.bf16.mxu0 0
    %1020 = vmatpush1.bf16.msra.mxu0 %v1007
    %1021 = vmatprep.subr.bf16.mxu0 0
    %1022 = vmatpush1.bf16.msra.mxu0 %v1006
    %1023 = vmatprep.subr.bf16.mxu0 0
    %1024 = vmatpush1.bf16.msra.mxu0 %v1005
    %1025 = vmatprep.subr.bf16.mxu0 0
    %1026 = vmatpush1.bf16.msra.mxu0 %v1004
    %1027 = vmatprep.subr.bf16.mxu0 0
    %1028 = vmatpush1.bf16.msra.mxu0 %v1003
    %1029 = vmatprep.subr.bf16.mxu0 0
    %1030 = vmatpush1.bf16.msra.mxu0 %v1002
    %1031 = vmatprep.subr.bf16.mxu0 0
    %1032 = vmatpush1.bf16.msra.mxu0 %v1001
    %1033 = vmatprep.subr.bf16.mxu0 0
    %1034 = vmatpush2.bf16.msra.mxu0 0
    %1035 = vmatprep.subr.bf16.mxu0 0
    %1036 = vmatpush2.bf16.msra.mxu0 0
    %1037 = vmatprep.subr.bf16.mxu0 0
    %1038 = vmatpush2.bf16.msra.mxu0 0
    %1039 = vmatprep.subr.bf16.mxu0 0
    %1040 = vmatpush2.bf16.msra.mxu0 0
    %1041 = vmatprep.subr.bf16.mxu0 0
    %1042 = vmatpush2.bf16.msra.mxu0 0
    %1043 = vmatprep.subr.bf16.mxu0 0
    %1044 = vmatpush2.bf16.msra.mxu0 0
    %1045 = vmatprep.subr.bf16.mxu0 0
    %1046 = vmatpush2.bf16.msra.mxu0 0
    %1047 = vmatprep.subr.bf16.mxu0 0
    %1048 = vmatpush2.bf16.msra.mxu0 0
    %1049 = vmatprep.mubr.bf16.mxu0 0
    %1050 = vmatmul.mubr.bf16.gmra.mxu0 %v945
    %v1051 = vpop.f32.mrf.mxu0
    %v1052 = vadd.f32 %v967, %v1051
    %v1053 = vpop.f32.mrf.mxu0
    %v1054 = vpop.f32.mrf.mxu0
    %v1055 = vadd.f32 %v967, %v1054
    %v1056 = vpop.f32.mrf.mxu0
    %1057 = vdwg.mxu0
    %v1058 = vlaneseq
    %v1059 = vand.u32 %v1058, 127
    %vm1060 = vcmp.lt.s32.totalorder %v1059, 4
    %v1061 = vsel %vm1060, %v1052, 0.0
    %v1062 = vsel %vm1060, %v1055, 0.0
    %v1063 = vmul.f32 %v1061, %v1061
    %v1064 = vmul.f32 %v1062, %v1062
    %1065 = vadd.xlane.f32.xlu0 %v1063
    %v1066 = vpop.xlane.xlu0 %1065
    %1067 = vadd.xlane.f32.xlu0 %v1064
    %v1068 = vpop.xlane.xlu0 %1067
    %v1069 = vrsqrt.pop %v1066
    %v1070 = vrsqrt.pop %v1068
    %v1071 = vmul.f32 %v1052, %v1069
    %v1072 = vmul.f32 %v1055, %v1070
    %v1073 = vsel %vm1060, %v1071, %v1052
    %v1074 = vsel %vm1060, %v1072, %v1055
    %1075 = vst [vmem:[#allocation11] sm:$0xff] %v1073
    %1076 = vst [vmem:[#allocation11 + $0x8] sm:$0xff] %v1074
    // Predicated region
    $region65: #{tpu_custom_call.1} parent=1 // pred_check
      _
    $region66: #{tpu_custom_call.1} parent=1 // pred_check_branch
      %1078 = sbr.rel (0) target = $region68
    $region67: #{tpu_custom_call.1} parent=1 // pred_region
      %s1080 = ssub.s32 256, 256
      %1081 = vsyncadd [#allocation4], %s1080
      %s1082 = sshll.u32 [#allocation11], 4
      %s1083 = int_to_ptr.vmem [resolvable:$true] %s1082
      %1088 = dma.vmem_to_hbm [thread:$0]  %s1083, 256, %s9, [#allocation4], 128, 128, 8
    $region68: #{tpu_custom_call.1} parent=1 // pred_fallthru
      _
    // Predicated region
    $region69: #{tpu_custom_call.1} parent=1 // pred_check
      _
    $region70: #{tpu_custom_call.1} parent=1 // pred_check_branch
      %1090 = sbr.rel (0) target = $region72
    $region71: #{tpu_custom_call.1} parent=1 // pred_region
      %1091 = dma.done [#allocation4], 256
    $region72: #{tpu_custom_call.1} parent=1 // pred_fallthru
      _
    %1092 = vsyncpa [#allocation3], 1
    %1093 = vsyncpa [#allocation6], 1
    %1094 = vsyncpa [#allocation9], 1
    %1095 = vsyncpa [#allocation4], 1

</llo_original>
